<compile_context>
chip_gen: v7x
topology: tpu7x:2x2x1
jax: 0.10.0
libtpu: 0.0.40
codegen_flags: <defaults>
</compile_context>

<pallas_src>
import jax
import jax.numpy as jnp
from jax import lax
from jax.experimental import pallas as pl
from jax.experimental.pallas import tpu as pltpu

EPS = 1e-5


def conv_bn_relu_kernel(p_ref, w_ref, o_ref):
    """Fused 3x3 conv (single im2col matmul over the whole batch) + training-mode BN + ReLU.

    p_ref: (K_pad, N*HW)    im2col patches, k = cin*9 + dy*3 + dx (zero-padded 27->32),
                            lanes = n*HW + h*W + w (dense).
    w_ref: (Cout, K_pad+2)  cols [0:K_pad) conv weights, col K_pad = gamma, col K_pad+1 = beta.
    o_ref: (N, Cout, HW)    output (pure reshape to NCHW in the wrapper).
    """
    N, Cout, HW = o_ref.shape
    K_pad = p_ref.shape[0]
    M = N * HW  # BatchNorm reduction size: N * H * W

    wp = w_ref[...]                                # (Cout, K_pad+2)
    w = wp[:, :K_pad]                              # (Cout, K_pad)
    gamma = wp[:, K_pad:K_pad + 1]                 # (Cout, 1)
    beta = wp[:, K_pad + 1:K_pad + 2]              # (Cout, 1)

    # --- convolution: one MXU matmul for the whole batch ---
    # Conv bias intentionally omitted: cancelled exactly by the batch-mean subtraction below
    # (training-mode BatchNorm only).
    conv = jnp.dot(w, p_ref[...], preferred_element_type=jnp.float32)  # (Cout, N*HW)

    # --- BatchNorm2d, training mode: per-channel mean / biased variance over (N, H, W) ---
    mean = jnp.sum(conv, axis=1, keepdims=True) * (1.0 / M)            # (Cout, 1)
    var = jnp.sum((conv - mean) ** 2, axis=1, keepdims=True) * (1.0 / M)

    scale = gamma * lax.rsqrt(var + EPS)                               # (Cout, 1)
    offset = beta - mean * scale                                       # (Cout, 1)

    # --- normalize (single FMA) + ReLU ---
    y = jnp.maximum(conv * scale + offset, 0.0)                        # (Cout, N*HW)

    # Lane-dense per-image stores; n*HW (0, 256, ...) is 128-aligned -> free slices.
    for n in range(N):
        o_ref[n] = y[:, n * HW:(n + 1) * HW]


def test_cnn_forward(x_nchw, w_oihw, b, gamma, beta):
    """NCHW in / NCHW out, matching TestCNN.forward (module in default training mode).

    `b` (conv bias) is accepted for parity with the PyTorch module but is mathematically
    redundant under batch-statistics BatchNorm, so it is folded out (training mode only).
    """
    del b  # cancelled exactly by training-mode BN mean subtraction
    N, Cin, H, W = x_nchw.shape
    Cout = w_oihw.shape[0]
    HW = H * W
    K = Cin * 9
    K_pad = 32  # zero-pad contraction dim 27 -> 32 (8-aligned, free in VMEM bytes)

    # im2col producer; allowed to fuse into the pallas_call input (allow_input_fusion).
    x = x_nchw.astype(jnp.float32)
    x_pad = jnp.pad(x, ((0, 0), (0, 0), (1, 1), (1, 1)))               # (N, Cin, H+2, W+2)
    taps = [x_pad[:, :, dy:dy + H, dx:dx + W] for dy in range(3) for dx in range(3)]
    patches = jnp.stack(taps, axis=2).reshape(N, K, HW)                # (N, 27, HW)
    patches = patches.transpose(1, 0, 2).reshape(K, N * HW)            # (27, N*HW)
    patches = jnp.pad(patches, ((0, K_pad - K), (0, 0)))               # (K_pad, N*HW)

    # Pack conv weights + gamma + beta into ONE small operand -> one DMA instead of three.
    w_mat = jnp.pad(w_oihw.reshape(Cout, K).astype(jnp.float32), ((0, 0), (0, K_pad - K)))
    w_packed = jnp.concatenate(
        [w_mat,
         gamma.reshape(Cout, 1).astype(jnp.float32),
         beta.reshape(Cout, 1).astype(jnp.float32)], axis=1)           # (Cout, K_pad+2)

    flops = 2 * Cout * K_pad * N * HW + 10 * Cout * N * HW
    bytes_accessed = 4 * (K_pad * N * HW + Cout * (K_pad + 2) + N * Cout * HW)

    out = pl.pallas_call(
        conv_bn_relu_kernel,
        out_shape=jax.ShapeDtypeStruct((N, Cout, HW), jnp.float32),
        in_specs=[
            pl.BlockSpec(memory_space=pltpu.MemorySpace.VMEM),
            pl.BlockSpec(memory_space=pltpu.MemorySpace.VMEM),
        ],
        out_specs=pl.BlockSpec(memory_space=pltpu.MemorySpace.VMEM),
        compiler_params=pltpu.CompilerParams(allow_input_fusion=[True, True]),
        cost_estimate=pl.CostEstimate(flops=flops, transcendentals=Cout,
                                      bytes_accessed=bytes_accessed),
    )(patches, w_packed)

    # Already in NCHW memory order -> pure reshape, no HBM transpose.
    return out.reshape(N, Cout, H, W)


def ref_forward(x_nchw, w_oihw, b, gamma, beta):
    """Pure-JAX reference (conv WITH bias + training-mode BN + ReLU) for correctness check."""
    y = lax.conv_general_dilated(
        x_nchw.astype(jnp.float32), w_oihw.astype(jnp.float32),
        window_strides=(1, 1), padding=((1, 1), (1, 1)),
        dimension_numbers=("NCHW", "OIHW", "NCHW"))
    y = y + b.reshape(1, -1, 1, 1)
    mean = y.mean(axis=(0, 2, 3), keepdims=True)
    var = ((y - mean) ** 2).mean(axis=(0, 2, 3), keepdims=True)
    y = (y - mean) * lax.rsqrt(var + EPS) * gamma.reshape(1, -1, 1, 1) + beta.reshape(1, -1, 1, 1)
    return jnp.maximum(y, 0.0)


if __name__ == "__main__":
    key = jax.random.PRNGKey(0)
    k_x, k_w, k_b = jax.random.split(key, 3)

    N, Cin, H, W, Cout = 2, 3, 16, 16, 8

    x = jax.random.normal(k_x, (N, Cin, H, W), dtype=jnp.float32)

    # Deterministic parameter init (shapes from nn.Conv2d(3, 8, 3) / nn.BatchNorm2d(8)).
    fan_in = Cin * 3 * 3
    bound = 1.0 / (fan_in ** 0.5)
    w = jax.random.uniform(k_w, (Cout, Cin, 3, 3), minval=-bound, maxval=bound, dtype=jnp.float32)
    b = jax.random.uniform(k_b, (Cout,), minval=-bound, maxval=bound, dtype=jnp.float32)
    gamma = jnp.ones((Cout,), jnp.float32)   # PyTorch BatchNorm2d default weight
    beta = jnp.zeros((Cout,), jnp.float32)   # PyTorch BatchNorm2d default bias

    fwd = jax.jit(test_cnn_forward)  # jit so the im2col producer can fuse into the pallas_call
    out = jax.block_until_ready(fwd(x, w, b, gamma, beta))
    ref = jax.block_until_ready(ref_forward(x, w, b, gamma, beta))

    assert out.shape == (N, Cout, H, W)
    assert jnp.allclose(out, ref, atol=1e-4, rtol=1e-4), "mismatch vs JAX reference"

    print("KERNEL_OK")
</pallas_src>

<mosaic_0001>
module attributes {stable_mosaic.version = 11 : i64} {
  func.func @conv_bn_relu_kernel(%arg0: memref<32x512xf32, #tpu.memory_space<vmem>>, %arg1: memref<8x34xf32, #tpu.memory_space<vmem>>, %arg2: memref<2x8x256xf32, #tpu.memory_space<vmem>>) attributes {dimension_semantics = [], scalar_prefetch = 0 : i64, scratch_operands = 0 : i64, tpu.core_type = #tpu.core_type<tc>} {
    %c0 = arith.constant 0 : index
    %c0_0 = arith.constant 0 : index
    %0 = vector.load %arg1[%c0, %c0_0] : memref<8x34xf32, #tpu.memory_space<vmem>>, vector<8x34xf32>
    %1 = vector.extract_strided_slice %0 {offsets = [0, 0], sizes = [8, 32], strides = [1, 1]} : vector<8x34xf32> to vector<8x32xf32>
    %2 = vector.extract_strided_slice %0 {offsets = [0, 32], sizes = [8, 1], strides = [1, 1]} : vector<8x34xf32> to vector<8x1xf32>
    %3 = vector.extract_strided_slice %0 {offsets = [0, 33], sizes = [8, 1], strides = [1, 1]} : vector<8x34xf32> to vector<8x1xf32>
    %c0_1 = arith.constant 0 : index
    %c0_2 = arith.constant 0 : index
    %4 = vector.load %arg0[%c0_1, %c0_2] : memref<32x512xf32, #tpu.memory_space<vmem>>, vector<32x512xf32>
    %cst = arith.constant dense<0.000000e+00> : vector<8x512xf32>
    %5 = tpu.matmul %1, %4, %cst {dimension_numbers = #tpu.dot_dimension_numbers<[1], [0], [0], [1], [0, 0, 1, 1], [], []>} : vector<8x32xf32>, vector<32x512xf32>, vector<8x512xf32> -> vector<8x512xf32>
    %cst_3 = arith.constant dense<0.000000e+00> : vector<8xf32>
    %6 = vector.multi_reduction <add>, %5, %cst_3 [1] : vector<8x512xf32> to vector<8xf32>
    %7 = vector.shape_cast %6 : vector<8xf32> to vector<8x1xf32>
    %cst_4 = arith.constant 0.001953125 : f32
    %8 = vector.broadcast %cst_4 : f32 to vector<8x1xf32>
    %9 = arith.mulf %7, %8 : vector<8x1xf32>
    %10 = vector.broadcast %9 : vector<8x1xf32> to vector<8x512xf32>
    %11 = arith.subf %5, %10 : vector<8x512xf32>
    %12 = arith.mulf %11, %11 : vector<8x512xf32>
    %cst_5 = arith.constant dense<0.000000e+00> : vector<8xf32>
    %13 = vector.multi_reduction <add>, %12, %cst_5 [1] : vector<8x512xf32> to vector<8xf32>
    %14 = vector.shape_cast %13 : vector<8xf32> to vector<8x1xf32>
    %cst_6 = arith.constant 0.001953125 : f32
    %15 = vector.broadcast %cst_6 : f32 to vector<8x1xf32>
    %16 = arith.mulf %14, %15 : vector<8x1xf32>
    %cst_7 = arith.constant 9.99999974E-6 : f32
    %17 = vector.broadcast %cst_7 : f32 to vector<8x1xf32>
    %18 = arith.addf %16, %17 : vector<8x1xf32>
    %19 = math.rsqrt %18 : vector<8x1xf32>
    %20 = arith.mulf %2, %19 : vector<8x1xf32>
    %21 = arith.mulf %9, %20 : vector<8x1xf32>
    %22 = arith.subf %3, %21 : vector<8x1xf32>
    %23 = vector.broadcast %20 : vector<8x1xf32> to vector<8x512xf32>
    %24 = arith.mulf %5, %23 : vector<8x512xf32>
    %25 = vector.broadcast %22 : vector<8x1xf32> to vector<8x512xf32>
    %26 = arith.addf %24, %25 : vector<8x512xf32>
    %cst_8 = arith.constant 0.000000e+00 : f32
    %27 = vector.broadcast %cst_8 : f32 to vector<8x512xf32>
    %28 = arith.maximumf %26, %27 : vector<8x512xf32>
    %29 = vector.extract_strided_slice %28 {offsets = [0, 0], sizes = [8, 256], strides = [1, 1]} : vector<8x512xf32> to vector<8x256xf32>
    %c0_9 = arith.constant 0 : index
    %c0_10 = arith.constant 0 : index
    %c0_11 = arith.constant 0 : index
    %30 = vector.load %arg2[%c0_9, %c0_10, %c0_11] : memref<2x8x256xf32, #tpu.memory_space<vmem>>, vector<1x8x256xf32>
    %31 = vector.shape_cast %30 : vector<1x8x256xf32> to vector<8x256xf32>
    %32 = vector.shape_cast %29 : vector<8x256xf32> to vector<1x8x256xf32>
    tpu.vector_store %arg2[%c0_9, %c0_10, %c0_11], %32 {strides = array<i32>} : memref<2x8x256xf32, #tpu.memory_space<vmem>>, vector<1x8x256xf32>,
    %33 = vector.extract_strided_slice %28 {offsets = [0, 256], sizes = [8, 256], strides = [1, 1]} : vector<8x512xf32> to vector<8x256xf32>
    %c1 = arith.constant 1 : index
    %c0_12 = arith.constant 0 : index
    %c0_13 = arith.constant 0 : index
    %34 = vector.load %arg2[%c1, %c0_12, %c0_13] : memref<2x8x256xf32, #tpu.memory_space<vmem>>, vector<1x8x256xf32>
    %35 = vector.shape_cast %34 : vector<1x8x256xf32> to vector<8x256xf32>
    %36 = vector.shape_cast %33 : vector<8x256xf32> to vector<1x8x256xf32>
    tpu.vector_store %arg2[%c1, %c0_12, %c0_13], %36 {strides = array<i32>} : memref<2x8x256xf32, #tpu.memory_space<vmem>>, vector<1x8x256xf32>,
    return
  }
}

</mosaic_0001>

<llo_original>
// kernel: test_cnn_forward.2
$region0: #{test_cnn_forward.2}
  #allocation0 [shape = 'u32[]', space=smem, size = 0x4, offset = 0x4, fixed_abs, tag = 'smem constant byte address 0x4 - core index']
  #allocation1 [shape = 'u32[144,128]{1,0:T(1,128)}', space=vmem, size = 0x12000, scoped, tag = 'internal scratch']
  #allocation2 [shape = 'u32[2048]{0}', space=vmem, size = 0x2000, scoped, tag = 'scoped memory for test_cnn_forward.2']
  #allocation3 [shape = 'u32[2048]{0}', space=vmem, size = 0x2000, scoped, tag = 'scoped memory for test_cnn_forward.2']
  #allocation4 [shape = 'u32[2048]{0}', space=vmem, size = 0x2000, scoped, tag = 'scoped memory for test_cnn_forward.2']
  #allocation5 [shape = 'u32[2048]{0}', space=vmem, size = 0x2000, scoped, tag = 'scoped memory for test_cnn_forward.2']
  #allocation6 [shape = 'u32[2048]{0}', space=vmem, size = 0x2000, scoped, tag = 'scoped memory for test_cnn_forward.2']
  #allocation7 [shape = 'u32[2048]{0}', space=vmem, size = 0x2000, scoped, tag = 'scoped memory for test_cnn_forward.2']
  #allocation8 [shape = 'u32[2048]{0}', space=vmem, size = 0x2000, scoped, tag = 'scoped memory for test_cnn_forward.2']
  #allocation9 [shape = 'u32[2048]{0}', space=vmem, size = 0x2000, scoped, tag = 'scoped memory for test_cnn_forward.2']
  #allocation10 [shape = 'u32[2048]{0}', space=vmem, size = 0x2000, scoped, tag = 'scoped memory for test_cnn_forward.2']
  #allocation11 [shape = 'u32[2048]{0}', space=vmem, size = 0x2000, scoped, tag = 'scoped memory for test_cnn_forward.2']
  #allocation12 [shape = 'u32[2048]{0}', space=vmem, size = 0x2000, scoped, tag = 'scoped memory for test_cnn_forward.2']
  #allocation13 [shape = 'u32[2048]{0}', space=vmem, size = 0x2000, scoped, tag = 'scoped memory for test_cnn_forward.2']
  #allocation14 [shape = 'u32[2048]{0}', space=vmem, size = 0x2000, scoped, tag = 'scoped memory for test_cnn_forward.2']
  #allocation15 [shape = 'u32[2048]{0}', space=vmem, size = 0x2000, scoped, tag = 'scoped memory for test_cnn_forward.2']
  #allocation16 [shape = 'u32[2048]{0}', space=vmem, size = 0x2000, scoped, tag = 'scoped memory for test_cnn_forward.2']
  #allocation17 [shape = 'u32[2048]{0}', space=vmem, size = 0x2000, scoped, tag = 'scoped memory for test_cnn_forward.2']
  #allocation18 [shape = 'u32[2048]{0}', space=vmem, size = 0x2000, scoped, tag = 'scoped memory for test_cnn_forward.2']
  #allocation19 [shape = 'u32[2048]{0}', space=vmem, size = 0x2000, scoped, tag = 'scoped memory for test_cnn_forward.2']
  #allocation20 [shape = 'u32[2048]{0}', space=vmem, size = 0x2000, scoped, tag = 'scoped memory for test_cnn_forward.2']
  #allocation21 [shape = 'u32[2048]{0}', space=vmem, size = 0x2000, scoped, tag = 'scoped memory for test_cnn_forward.2']
  %s0 = inlined_call_operand.vmem [shape: f32[27,512], index: 0, kind: input, shape index: {}]
  %s1 = inlined_call_operand.<no memory space> [shape: f32[], index: 1, kind: input, shape index: {}]
  %s2 = inlined_call_operand.vmem [shape: f32[8,27], index: 2, kind: input, shape index: {}]
  %s3 = inlined_call_operand.vmem [shape: f32[8,1], index: 3, kind: input, shape index: {}]
  %s4 = inlined_call_operand.<no memory space> [shape: f32[], index: 4, kind: input, shape index: {}]
  %s5 = inlined_call_operand.vmem [shape: f32[8,1], index: 5, kind: input, shape index: {}]
  %s6 = inlined_call_operand.<no memory space> [shape: s32[], index: 6, kind: input, shape index: {}]
  %s7 = inlined_call_operand.vmem [shape: f32[2,8,256], index: 7, kind: output, shape index: {}]
  %s8 = sld [smem:[#allocation0]]
  $region26: #{test_cnn_forward.2} parent=0
    _
  %s10 = ssub.s32 1, %s8
  %s11 = scalar_select 0, %s10, %s8
  %v12 = vstv %s1
  %v13 = vstv %s1
  %v14 = vstv %s4
  %v15 = vstv %s4
  %v16 = vstv %s4
  %v17 = vstv %s6
  $region1: #{test_cnn_forward.2} parent=0
    #allocation22 [shape = 'u8[65536]{0}', space=vmem, size = 0x10000, dematerialized = true, scoped, tag = 'FusionAdapter Buffer %fusion.1 = f32[32,512]{1,0:T(8,128)} fusion(%param_0.74, %param_1.69), kind=kLoop, calls=%fused_computation.9.clone, metadata={op_name="jit(test_cnn_forward)/jit(_pad)/pad" stack_frame_id=11}']
    #allocation23 [shape = 'u8[4096]{0}', space=vmem, size = 0x1000, dematerialized = true, scoped, tag = 'FusionAdapter Buffer %fusion.19 = f32[8,34]{1,0:T(8,128)} fusion(%param_2.49, %param_1.69, %param_3.50, %param_4.17, %param_5.9, %param_6.10), kind=kLoop, calls=%fused_computation.28.clone.clone, metadata={op_name="jit(test_cnn_forward)/concatenate" stack_frame_id=16}']
    // Predicated region
    $region2: #{test_cnn_forward.2} parent=1 // pred_check
      _
    $region3: #{test_cnn_forward.2} parent=1 // pred_check_branch
      %19 = sbr.rel (0) target = $region5
    $region4: #{test_cnn_forward.2} parent=1 // pred_region
      _
    $region5: #{test_cnn_forward.2} parent=1 // pred_fallthru
      _
    // Predicated region
    $region6: #{test_cnn_forward.2} parent=1 // pred_check
      _
    $region7: #{test_cnn_forward.2} parent=1 // pred_check_branch
      %21 = sbr.rel (0) target = $region9
    $region8: #{test_cnn_forward.2} parent=1 // pred_region
      _
    $region9: #{test_cnn_forward.2} parent=1 // pred_fallthru
      _
    // Predicated region
    $region10: #{test_cnn_forward.2} parent=1 // pred_check
      _
    $region11: #{test_cnn_forward.2} parent=1 // pred_check_branch
      %23 = sbr.rel (0) target = $region13
    $region12: #{test_cnn_forward.2} parent=1 // pred_region
      %s25 = ssub.s32 1, 0
      %s26 = smul.u32 128, %s25
      %p27 = scmp.lt.s32.totalorder 0, 0
      %s28 = scalar_select %p27, 0, 0
      %s29 = smul.addr %s28, 8
      %s30 = scalar_lea.vmem %s3, %s29
      %s32 = ssub.s32 1, 0
      %s33 = smul.u32 128, %s32
    $region13: #{test_cnn_forward.2} parent=1 // pred_fallthru
      _
    // Predicated region
    $region14: #{test_cnn_forward.2} parent=1 // pred_check
      _
    $region15: #{test_cnn_forward.2} parent=1 // pred_check_branch
      %35 = sbr.rel (0) target = $region17
    $region16: #{test_cnn_forward.2} parent=1 // pred_region
      %s37 = ssub.s32 1, 0
      %s38 = smul.u32 128, %s37
      %p39 = scmp.lt.s32.totalorder 0, 0
      %s40 = scalar_select %p39, 0, 0
      %s41 = smul.addr %s40, 8
      %s42 = scalar_lea.vmem %s5, %s41
      %s44 = ssub.s32 1, 0
      %s45 = smul.u32 128, %s44
    $region17: #{test_cnn_forward.2} parent=1 // pred_fallthru
      _
    %s47 = ssub.s32 1, 0
    %s48 = smul.u32 128, %s47
    %p49 = scmp.lt.s32.totalorder 0, 0
    %s50 = scalar_select %p49, 0, 0
    %s51 = smul.addr %s50, 8
    %s52 = scalar_lea.vmem %s3, %s51
    %s54 = ssub.s32 1, 0
    %s55 = smul.u32 128, %s54
    %p56 = scmp.lt.s32.totalorder 0, 0
    %s57 = scalar_select %p56, 0, 0
    %s58 = smul.addr %s57, 8
    %s59 = scalar_lea.vmem %s5, %s58
    %s61 = ssub.s32 1, 0
    %s62 = smul.u32 128, %s61
    %p63 = scmp.lt.s32.totalorder 0, 0
    %s64 = scalar_select %p63, 0, 0
    %s65 = smul.addr %s64, 8
    %s66 = scalar_lea.vmem %s3, %s65
    %s68 = ssub.s32 1, 0
    %s69 = smul.u32 128, %s68
    %s71 = ssub.s32 1, 0
    %s72 = smul.u32 128, %s71
    %p73 = scmp.lt.s32.totalorder 0, 0
    %s74 = scalar_select %p73, 0, 0
    %s75 = smul.addr %s74, 8
    %s76 = scalar_lea.vmem %s5, %s75
    %s78 = ssub.s32 1, 0
    %s79 = smul.u32 128, %s78
    %v80 = vld [vmem:[%s0] sm:$0xff]
    %v81 = vlaneseq
    %v82 = vshrl.u32 %v81, 7
    %vm84 = vcmp.lt.s32.totalorder %v82, 27
    %v85 = vsel %vm84, %v80, %v12
    %87 = vst [vmem:[#allocation22] sm:$0xff] %v85
    %s88 = scalar_lea.vmem %s0, 8
    %v89 = vld [vmem:[%s88] sm:$0xff]
    %v90 = vlaneseq
    %v91 = vshrl.u32 %v90, 7
    %vm93 = vcmp.lt.s32.totalorder %v91, 27
    %v94 = vsel %vm93, %v89, %v12
    %s95 = scalar_lea.vmem [#allocation22], 8
    %97 = vst [vmem:[%s95] sm:$0xff] %v94
    %s98 = scalar_lea.vmem %s0, 16
    %v99 = vld [vmem:[%s98] sm:$0xff]
    %v100 = vlaneseq
    %v101 = vshrl.u32 %v100, 7
    %vm103 = vcmp.lt.s32.totalorder %v101, 27
    %v104 = vsel %vm103, %v99, %v12
    %s105 = scalar_lea.vmem [#allocation22], 16
    %107 = vst [vmem:[%s105] sm:$0xff] %v104
    %s108 = scalar_lea.vmem %s0, 24
    %v109 = vld [vmem:[%s108] sm:$0xff]
    %v110 = vlaneseq
    %v111 = vshrl.u32 %v110, 7
    %vm113 = vcmp.lt.s32.totalorder %v111, 27
    %v114 = vsel %vm113, %v109, %v12
    %s115 = scalar_lea.vmem [#allocation22], 24
    %117 = vst [vmem:[%s115] sm:$0xff] %v114
    %s118 = scalar_lea.vmem %s0, 32
    %v119 = vld [vmem:[%s118] sm:$0xff]
    %v120 = vlaneseq
    %v121 = vshrl.u32 %v120, 7
    %v122 = vadd.s32 %v121, 8
    %vm123 = vcmp.lt.s32.totalorder %v122, 27
    %v124 = vsel %vm123, %v119, %v12
    %s125 = scalar_lea.vmem [#allocation22], 32
    %127 = vst [vmem:[%s125] sm:$0xff] %v124
    %s128 = scalar_lea.vmem %s0, 40
    %v129 = vld [vmem:[%s128] sm:$0xff]
    %v130 = vlaneseq
    %v131 = vshrl.u32 %v130, 7
    %v132 = vadd.s32 %v131, 8
    %vm133 = vcmp.lt.s32.totalorder %v132, 27
    %v134 = vsel %vm133, %v129, %v12
    %s135 = scalar_lea.vmem [#allocation22], 40
    %137 = vst [vmem:[%s135] sm:$0xff] %v134
    %s138 = scalar_lea.vmem %s0, 48
    %v139 = vld [vmem:[%s138] sm:$0xff]
    %v140 = vlaneseq
    %v141 = vshrl.u32 %v140, 7
    %v142 = vadd.s32 %v141, 8
    %vm143 = vcmp.lt.s32.totalorder %v142, 27
    %v144 = vsel %vm143, %v139, %v12
    %s145 = scalar_lea.vmem [#allocation22], 48
    %147 = vst [vmem:[%s145] sm:$0xff] %v144
    %s148 = scalar_lea.vmem %s0, 56
    %v149 = vld [vmem:[%s148] sm:$0xff]
    %v150 = vlaneseq
    %v151 = vshrl.u32 %v150, 7
    %v152 = vadd.s32 %v151, 8
    %vm153 = vcmp.lt.s32.totalorder %v152, 27
    %v154 = vsel %vm153, %v149, %v12
    %s155 = scalar_lea.vmem [#allocation22], 56
    %157 = vst [vmem:[%s155] sm:$0xff] %v154
    %s158 = scalar_lea.vmem %s0, 64
    %v159 = vld [vmem:[%s158] sm:$0xff]
    %v160 = vlaneseq
    %v161 = vshrl.u32 %v160, 7
    %v162 = vadd.s32 %v161, 16
    %vm163 = vcmp.lt.s32.totalorder %v162, 27
    %v164 = vsel %vm163, %v159, %v12
    %s165 = scalar_lea.vmem [#allocation22], 64
    %167 = vst [vmem:[%s165] sm:$0xff] %v164
    %s168 = scalar_lea.vmem %s0, 72
    %v169 = vld [vmem:[%s168] sm:$0xff]
    %v170 = vlaneseq
    %v171 = vshrl.u32 %v170, 7
    %v172 = vadd.s32 %v171, 16
    %vm173 = vcmp.lt.s32.totalorder %v172, 27
    %v174 = vsel %vm173, %v169, %v12
    %s175 = scalar_lea.vmem [#allocation22], 72
    %177 = vst [vmem:[%s175] sm:$0xff] %v174
    %s178 = scalar_lea.vmem %s0, 80
    %v179 = vld [vmem:[%s178] sm:$0xff]
    %v180 = vlaneseq
    %v181 = vshrl.u32 %v180, 7
    %v182 = vadd.s32 %v181, 16
    %vm183 = vcmp.lt.s32.totalorder %v182, 27
    %v184 = vsel %vm183, %v179, %v12
    %s185 = scalar_lea.vmem [#allocation22], 80
    %187 = vst [vmem:[%s185] sm:$0xff] %v184
    %s188 = scalar_lea.vmem %s0, 88
    %v189 = vld [vmem:[%s188] sm:$0xff]
    %v190 = vlaneseq
    %v191 = vshrl.u32 %v190, 7
    %v192 = vadd.s32 %v191, 16
    %vm193 = vcmp.lt.s32.totalorder %v192, 27
    %v194 = vsel %vm193, %v189, %v12
    %s195 = scalar_lea.vmem [#allocation22], 88
    %197 = vst [vmem:[%s195] sm:$0xff] %v194
    %s198 = scalar_lea.vmem %s0, 96
    %v199 = vld [vmem:[%s198] sm:$0xff]
    %v200 = vlaneseq
    %v201 = vshrl.u32 %v200, 7
    %v202 = vadd.s32 %v201, 24
    %vm203 = vcmp.lt.s32.totalorder %v202, 27
    %v204 = vsel %vm203, %v199, %v12
    %s205 = scalar_lea.vmem [#allocation22], 96
    %207 = vst [vmem:[%s205] sm:$0xff] %v204
    %s208 = scalar_lea.vmem %s0, 104
    %v209 = vld [vmem:[%s208] sm:$0xff]
    %v210 = vlaneseq
    %v211 = vshrl.u32 %v210, 7
    %v212 = vadd.s32 %v211, 24
    %vm213 = vcmp.lt.s32.totalorder %v212, 27
    %v214 = vsel %vm213, %v209, %v12
    %s215 = scalar_lea.vmem [#allocation22], 104
    %217 = vst [vmem:[%s215] sm:$0xff] %v214
    %s218 = scalar_lea.vmem %s0, 112
    %v219 = vld [vmem:[%s218] sm:$0xff]
    %v220 = vlaneseq
    %v221 = vshrl.u32 %v220, 7
    %v222 = vadd.s32 %v221, 24
    %vm223 = vcmp.lt.s32.totalorder %v222, 27
    %v224 = vsel %vm223, %v219, %v12
    %s225 = scalar_lea.vmem [#allocation22], 112
    %227 = vst [vmem:[%s225] sm:$0xff] %v224
    %s228 = scalar_lea.vmem %s0, 120
    %v229 = vld [vmem:[%s228] sm:$0xff]
    %v230 = vlaneseq
    %v231 = vshrl.u32 %v230, 7
    %v232 = vadd.s32 %v231, 24
    %vm233 = vcmp.lt.s32.totalorder %v232, 27
    %v234 = vsel %vm233, %v229, %v12
    %s235 = scalar_lea.vmem [#allocation22], 120
    %237 = vst [vmem:[%s235] sm:$0xff] %v234
    %v238 = vld [vmem:[%s2] sm:$0xff]
    %v239 = vlaneseq
    %v240 = vand.u32 %v239, 127
    %vm242 = vcmp.lt.s32.totalorder %v240, 27
    %v243 = vsel %vm242, %v238, %v13
    %s244 = ssub.s32 0, 0
    %p245 = scmp.lt.s32.totalorder %s244, 0
    %s246 = scalar_select %p245, 0, 255
    %v247 = vld [vmem:[%s66] sm:%s246]
    %v248 = vlaneseq
    %v249 = vand.u32 %v248, 127
    %v250 = vadd.s32 %v249, 128
    %vm251 = vcmp.lt.s32.totalorder %v250, 129
    %v252 = vsel %vm251, %v247, %v14
    %v253 = vlaneseq
    %v254 = vand.u32 %v253, 127
    %vm255 = vcmp.lt.s32.totalorder %v254, 95
    %v256 = vsel %vm255, %v252, %v14
    %257 = vrot.lane.b32.xlu0 %v256, 33
    %v258 = vpop.permute.xlu0 %257
    %s259 = ssub.s32 0, 0
    %p260 = scmp.lt.s32.totalorder %s259, 0
    %s261 = scalar_select %p260, 0, 255
    %v262 = vld [vmem:[%s76] sm:%s261]
    %v263 = vlaneseq
    %v264 = vand.u32 %v263, 127
    %v265 = vadd.s32 %v264, 128
    %vm266 = vcmp.lt.s32.totalorder %v265, 129
    %v267 = vsel %vm266, %v262, %v16
    %v268 = vlaneseq
    %v269 = vand.u32 %v268, 127
    %vm270 = vcmp.lt.s32.totalorder %v269, 96
    %v271 = vsel %vm270, %v267, %v16
    %272 = vrot.lane.b32.xlu0 %v271, 32
    %v273 = vpop.permute.xlu0 %272
    %v274 = vlaneseq
    %v275 = vand.u32 %v274, 127
    %278 = xla_tuple %v275, %v17
    %279 = xla_tuple %278
    %vm280 = vcmp.lt.s32.totalorder %v275, %v17
    %v281 = vsel %vm280, 1, 0
    %282 = xla_tuple %v281
    %283 = xla_tuple %v281, %v243, %v15
    %284 = xla_tuple %283
    %v285 = vsel %vm280, %v243, %v15
    %286 = xla_tuple %v285
    %287 = xla_tuple %v285, %v273
    %288 = xla_tuple %287
    %v289 = vmax.f32 %v285, %v273
    %290 = xla_tuple %v289
    %291 = xla_tuple %v289, %v258
    %292 = xla_tuple %291
    %v293 = vmax.f32 %v289, %v258
    %294 = xla_tuple %v293
    %296 = vst [vmem:[#allocation23] sm:$0xff] %v293
    %v297 = vld [vmem:[#allocation23] sm:$0xff]
    %v298 = vld [vmem:[#allocation22] sm:$0xff]
    %v299 = vld [vmem:[#allocation22 + $0x8] sm:$0xff]
    %v300 = vld [vmem:[#allocation22 + $0x10] sm:$0xff]
    %v301 = vld [vmem:[#allocation22 + $0x18] sm:$0xff]
    %v302 = vld [vmem:[#allocation22 + $0x20] sm:$0xff]
    %v303 = vld [vmem:[#allocation22 + $0x28] sm:$0xff]
    %v304 = vld [vmem:[#allocation22 + $0x30] sm:$0xff]
    %v305 = vld [vmem:[#allocation22 + $0x38] sm:$0xff]
    %v306 = vld [vmem:[#allocation22 + $0x40] sm:$0xff]
    %v307 = vld [vmem:[#allocation22 + $0x48] sm:$0xff]
    %v308 = vld [vmem:[#allocation22 + $0x50] sm:$0xff]
    %v309 = vld [vmem:[#allocation22 + $0x58] sm:$0xff]
    %v310 = vld [vmem:[#allocation22 + $0x60] sm:$0xff]
    %v311 = vld [vmem:[#allocation22 + $0x68] sm:$0xff]
    %v312 = vld [vmem:[#allocation22 + $0x70] sm:$0xff]
    %v313 = vld [vmem:[#allocation22 + $0x78] sm:$0xff]
    %vm314 = vcmask 261120
    %v316 = vsel %vm314, %v297, 0
    %318 = vmatprep.subr.mxu0 %v299
    %319 = vmatpush1.msra.mxu0 %v298
    %320 = vmatprep.subr.mxu0 %v303
    %321 = vmatpush1.msra.mxu0 %v302
    %322 = vmatprep.subr.mxu0 %v307
    %323 = vmatpush1.msra.mxu0 %v306
    %324 = vmatprep.subr.mxu0 %v311
    %325 = vmatpush1.msra.mxu0 %v310
    %326 = vmatprep.subr.mxu0 0.0
    %327 = vmatpush1.msra.mxu0 0.0
    %328 = vmatprep.subr.mxu0 0.0
    %329 = vmatpush1.msra.mxu0 0.0
    %330 = vmatprep.subr.mxu0 0.0
    %331 = vmatpush1.msra.mxu0 0.0
    %332 = vmatprep.subr.mxu0 0.0
    %333 = vmatpush1.msra.mxu0 0.0
    %334 = vmatprep.subr.mxu0 0.0
    %335 = vmatpush1.msra.mxu0 0.0
    %336 = vmatprep.subr.mxu0 0.0
    %337 = vmatpush1.msra.mxu0 0.0
    %338 = vmatprep.subr.mxu0 0.0
    %339 = vmatpush1.msra.mxu0 0.0
    %340 = vmatprep.subr.mxu0 0.0
    %341 = vmatpush1.msra.mxu0 0.0
    %342 = vmatprep.subr.mxu0 0.0
    %343 = vmatpush1.msra.mxu0 0.0
    %344 = vmatprep.subr.mxu0 0.0
    %345 = vmatpush1.msra.mxu0 0.0
    %346 = vmatprep.subr.mxu0 0.0
    %347 = vmatpush1.msra.mxu0 0.0
    %348 = vmatprep.subr.mxu0 0.0
    %349 = vmatpush1.msra.mxu0 0.0
    %350 = vmatprep.subr.mxu0 0.0
    %351 = vmatpush1.msra.mxu0 0.0
    %352 = vmatprep.subr.mxu0 0.0
    %353 = vmatpush1.msra.mxu0 0.0
    %354 = vmatprep.subr.mxu0 0.0
    %355 = vmatpush1.msra.mxu0 0.0
    %356 = vmatprep.subr.mxu0 0.0
    %357 = vmatpush1.msra.mxu0 0.0
    %358 = vmatprep.subr.mxu0 0.0
    %359 = vmatpush1.msra.mxu0 0.0
    %360 = vmatprep.subr.mxu0 0.0
    %361 = vmatpush1.msra.mxu0 0.0
    %362 = vmatprep.subr.mxu0 0.0
    %363 = vmatpush1.msra.mxu0 0.0
    %364 = vmatprep.subr.mxu0 0.0
    %365 = vmatpush1.msra.mxu0 0.0
    %366 = vmatprep.subr.mxu0 0.0
    %367 = vmatpush1.msra.mxu0 0.0
    %368 = vmatprep.subr.mxu0 0.0
    %369 = vmatpush1.msra.mxu0 0.0
    %370 = vmatprep.subr.mxu0 0.0
    %371 = vmatpush1.msra.mxu0 0.0
    %372 = vmatprep.subr.mxu0 0.0
    %373 = vmatpush1.msra.mxu0 0.0
    %374 = vmatprep.subr.mxu0 0.0
    %375 = vmatpush1.msra.mxu0 0.0
    %376 = vmatprep.subr.mxu0 0.0
    %377 = vmatpush1.msra.mxu0 0.0
    %378 = vmatprep.subr.mxu0 0.0
    %379 = vmatpush1.msra.mxu0 0.0
    %380 = vmatprep.subr.mxu0 0.0
    %381 = vmatpush1.msra.mxu0 0.0
    %382 = vmatprep.mubr.f32.mxu0 0.0
    %383 = vmatmul.mubr.f32.gmra.mrb[0].mxu0 %v316
    %v384 = vpop.f32.mrb[0].mxu0
    %v385 = vadd.f32 0.0, %v384
    %v386 = vpop.f32.mrb[0].mxu0
    %v387 = vadd.f32 0.0, %v386
    %388 = vdwg.mxu0
    %389 = vmatprep.subr.mxu0 %v301
    %390 = vmatpush1.msra.mxu0 %v300
    %391 = vmatprep.subr.mxu0 %v305
    %392 = vmatpush1.msra.mxu0 %v304
    %393 = vmatprep.subr.mxu0 %v309
    %394 = vmatpush1.msra.mxu0 %v308
    %395 = vmatprep.subr.mxu0 %v313
    %396 = vmatpush1.msra.mxu0 %v312
    %397 = vmatprep.subr.mxu0 0.0
    %398 = vmatpush1.msra.mxu0 0.0
    %399 = vmatprep.subr.mxu0 0.0
    %400 = vmatpush1.msra.mxu0 0.0
    %401 = vmatprep.subr.mxu0 0.0
    %402 = vmatpush1.msra.mxu0 0.0
    %403 = vmatprep.subr.mxu0 0.0
    %404 = vmatpush1.msra.mxu0 0.0
    %405 = vmatprep.subr.mxu0 0.0
    %406 = vmatpush1.msra.mxu0 0.0
    %407 = vmatprep.subr.mxu0 0.0
    %408 = vmatpush1.msra.mxu0 0.0
    %409 = vmatprep.subr.mxu0 0.0
    %410 = vmatpush1.msra.mxu0 0.0
    %411 = vmatprep.subr.mxu0 0.0
    %412 = vmatpush1.msra.mxu0 0.0
    %413 = vmatprep.subr.mxu0 0.0
    %414 = vmatpush1.msra.mxu0 0.0
    %415 = vmatprep.subr.mxu0 0.0
    %416 = vmatpush1.msra.mxu0 0.0
    %417 = vmatprep.subr.mxu0 0.0
    %418 = vmatpush1.msra.mxu0 0.0
    %419 = vmatprep.subr.mxu0 0.0
    %420 = vmatpush1.msra.mxu0 0.0
    %421 = vmatprep.subr.mxu0 0.0
    %422 = vmatpush1.msra.mxu0 0.0
    %423 = vmatprep.subr.mxu0 0.0
    %424 = vmatpush1.msra.mxu0 0.0
    %425 = vmatprep.subr.mxu0 0.0
    %426 = vmatpush1.msra.mxu0 0.0
    %427 = vmatprep.subr.mxu0 0.0
    %428 = vmatpush1.msra.mxu0 0.0
    %429 = vmatprep.subr.mxu0 0.0
    %430 = vmatpush1.msra.mxu0 0.0
    %431 = vmatprep.subr.mxu0 0.0
    %432 = vmatpush1.msra.mxu0 0.0
    %433 = vmatprep.subr.mxu0 0.0
    %434 = vmatpush1.msra.mxu0 0.0
    %435 = vmatprep.subr.mxu0 0.0
    %436 = vmatpush1.msra.mxu0 0.0
    %437 = vmatprep.subr.mxu0 0.0
    %438 = vmatpush1.msra.mxu0 0.0
    %439 = vmatprep.subr.mxu0 0.0
    %440 = vmatpush1.msra.mxu0 0.0
    %441 = vmatprep.subr.mxu0 0.0
    %442 = vmatpush1.msra.mxu0 0.0
    %443 = vmatprep.subr.mxu0 0.0
    %444 = vmatpush1.msra.mxu0 0.0
    %445 = vmatprep.subr.mxu0 0.0
    %446 = vmatpush1.msra.mxu0 0.0
    %447 = vmatprep.subr.mxu0 0.0
    %448 = vmatpush1.msra.mxu0 0.0
    %449 = vmatprep.subr.mxu0 0.0
    %450 = vmatpush1.msra.mxu0 0.0
    %451 = vmatprep.subr.mxu0 0.0
    %452 = vmatpush1.msra.mxu0 0.0
    %453 = vmatprep.mubr.f32.mxu0 0.0
    %454 = vmatmul.mubr.f32.gmra.mrb[0].mxu0 %v316
    %v455 = vpop.f32.mrb[0].mxu0
    %v456 = vadd.f32 0.0, %v455
    %v457 = vpop.f32.mrb[0].mxu0
    %v458 = vadd.f32 0.0, %v457
    %459 = vdwg.mxu0
    %v460 = vadd.f32 %v385, %v387
    %v461 = vadd.f32 %v460, %v456
    %v462 = vadd.f32 %v461, %v458
    %463 = vadd.xlane.f32.xlu0 %v462
    %v464 = vpop.xlane.xlu0 %463
    %v465 = vmul.f32 %v464, 0.001953125
    %v466 = vsub.f32 %v385, %v465
    %v467 = vsub.f32 %v387, %v465
    %v468 = vsub.f32 %v456, %v465
    %v469 = vsub.f32 %v458, %v465
    %v470 = vmul.f32 %v466, %v466
    %v471 = vmul.f32 %v467, %v467
    %v472 = vmul.f32 %v468, %v468
    %v473 = vmul.f32 %v469, %v469
    %v474 = vadd.f32 %v470, %v471
    %v475 = vadd.f32 %v474, %v472
    %v476 = vadd.f32 %v475, %v473
    %477 = vadd.xlane.f32.xlu0 %v476
    %v478 = vpop.xlane.xlu0 %477
    %v479 = vmul.f32 %v478, 0.001953125
    %v480 = vadd.f32 %v479, 1e-05
    %v481 = vrsqrt.pop %v480
    %v482 = vmul.f32 %v297, %v481
    %v483 = vmul.f32 %v465, %v482
    %485 = vrot.lane.b32.xlu0 %v483, 1
    %v486 = vpop.permute.xlu0 %485
    %v488 = vsub.f32 %v297, %v486
    %490 = vset.pattern.permute.xlu0 32
    %491 = vperm.xlu0 %490, %v482
    %v492 = vpop.permute.xlu0 %491
    %v494 = vmul.f32 %v385, %v492
    %v495 = vmul.f32 %v387, %v492
    %v496 = vmul.f32 %v456, %v492
    %v497 = vmul.f32 %v458, %v492
    %499 = vset.pattern.permute.xlu0 33
    %500 = vperm.xlu0 %499, %v488
    %v501 = vpop.permute.xlu0 %500
    %v503 = vadd.f32 %v494, %v501
    %v504 = vadd.f32 %v495, %v501
    %v505 = vadd.f32 %v496, %v501
    %v506 = vadd.f32 %v497, %v501
    %v507 = vmax.f32 %v503, 0.0
    %v508 = vmax.f32 %v504, 0.0
    %v509 = vmax.f32 %v505, 0.0
    %v510 = vmax.f32 %v506, 0.0
    %511 = vst [vmem:[%s7] sm:$0xff] %v507
    %512 = vst [vmem:[%s7 + $0x8] sm:$0xff] %v508
    %s513 = scalar_lea.vmem %s7, 16
    %514 = vst [vmem:[%s513] sm:$0xff] %v509
    %515 = vst [vmem:[%s513 + $0x8] sm:$0xff] %v510
    // Predicated region
    $region18: #{test_cnn_forward.2} parent=1 // pred_check
      _
    $region19: #{test_cnn_forward.2} parent=1 // pred_check_branch
      %517 = sbr.rel (0) target = $region21
    $region20: #{test_cnn_forward.2} parent=1 // pred_region
      _
    $region21: #{test_cnn_forward.2} parent=1 // pred_fallthru
      _
    // Predicated region
    $region22: #{test_cnn_forward.2} parent=1 // pred_check
      _
    $region23: #{test_cnn_forward.2} parent=1 // pred_check_branch
      %519 = sbr.rel (0) target = $region25
    $region24: #{test_cnn_forward.2} parent=1 // pred_region
      _
    $region25: #{test_cnn_forward.2} parent=1 // pred_fallthru
      _

</llo_original>
